<compile_context>
chip_gen: v7x
topology: tpu7x:2x2x1
jax: 0.10.0
libtpu: 0.0.40
codegen_flags: <defaults>
</compile_context>

<pallas_src>
import functools
import math

import jax
import jax.numpy as jnp
from jax.experimental import pallas as pl
from jax.experimental.pallas import tpu as pltpu


def _round_up(x, m):
    return ((x + m - 1) // m) * m


def _time_embedding_kernel(t_ref, w1_ref, b1_ref, w2_ref, b2_ref, o_ref):
    """Fused sinusoidal embedding + MLP, batch-on-lanes (transposed) layout.

    t_ref  : (1, TB)        timesteps (float32), batch on lanes
    w1_ref : (4*dim, dim)   first Linear weight, native PyTorch (out, in)
    b1_ref : (4*dim, 1)
    w2_ref : (dim, 4*dim)   second Linear weight, native PyTorch (out, in)
    b2_ref : (dim, 1)
    o_ref  : (dim, TB)      out^T, batch on lanes
    """
    hid, dim = w1_ref.shape
    half = dim // 2

    # Frequencies along sublanes: exp(k * -log(10000)/half), k = 0..half-1.
    scale = -math.log(10000.0) / float(half)
    k = jax.lax.broadcasted_iota(jnp.int32, (half, 1), 0).astype(jnp.float32)
    freqs = jnp.exp(k * jnp.float32(scale))                 # (half, 1)

    t = t_ref[...]                                          # (1, TB) f32
    ang = freqs * t                                         # (half, TB), lane-dense
    # Concat along sublanes -> e^T = [sin; cos] of shape (dim, TB).
    e_t = jnp.concatenate([jnp.sin(ang), jnp.cos(ang)], axis=0)

    # h^T = W1 @ e^T + b1   (hid, dim) x (dim, TB) -> (hid, TB)
    h = (
        jnp.dot(w1_ref[...], e_t, preferred_element_type=jnp.float32)
        + b1_ref[...].astype(jnp.float32)
    )
    h = jnp.maximum(h, 0.0)                                 # ReLU

    # out^T = W2 @ h^T + b2   (dim, hid) x (hid, TB) -> (dim, TB)
    out = (
        jnp.dot(w2_ref[...], h.astype(w2_ref.dtype),
                preferred_element_type=jnp.float32)
        + b2_ref[...].astype(jnp.float32)
    )
    o_ref[...] = out.astype(o_ref.dtype)


@functools.partial(jax.jit, static_argnames=("dim",))
def time_embedding_forward(t, w1, b1, w2, b2, *, dim):
    """PyTorch-equivalent forward.

    t  : (B,)            timesteps
    w1 : (4*dim, dim)    nn.Linear(dim, 4*dim).weight   (out, in)
    b1 : (4*dim,)
    w2 : (dim, 4*dim)    nn.Linear(4*dim, dim).weight   (out, in)
    b2 : (dim,)
    returns (B, dim) float32
    """
    assert dim % 2 == 0, "TimeEmbedding requires an even dim"
    B = t.shape[0]
    hid = 4 * dim

    # Batch tile: lane-aligned (128), adaptive so padding waste stays small and
    # grid-step overhead is low for big batches. Force >=2 steps for mid/large
    # batches so both v7x TensorCores get work (no effect on v5e/v6e).
    MAX_TB = 4096
    n_steps = pl.cdiv(B, MAX_TB)
    if B >= 256:
        n_steps = max(n_steps, 2)
    TB = _round_up(max(pl.cdiv(B, n_steps), 1), 128)
    B_pad = n_steps * TB

    t_f = t.astype(jnp.float32)
    if B_pad != B:
        t_f = jnp.pad(t_f, (0, B_pad - B))
    t_row = t_f.reshape(1, B_pad)                           # batch on lanes

    # Biases as columns (broadcast along lanes inside the kernel).
    b1_c = b1.reshape(hid, 1)
    b2_c = b2.reshape(dim, 1)

    cost = pl.CostEstimate(
        flops=4 * hid * dim * B_pad,
        transcendentals=B_pad * dim + dim // 2,
        bytes_accessed=4 * (B_pad + 2 * hid * dim + hid + dim + dim * B_pad),
    )

    out_t = pl.pallas_call(
        _time_embedding_kernel,
        out_shape=jax.ShapeDtypeStruct((dim, B_pad), jnp.float32),
        grid_spec=pltpu.PrefetchScalarGridSpec(
            num_scalar_prefetch=0,
            grid=(n_steps,),
            in_specs=[
                pl.BlockSpec((1, TB), lambda i: (0, i)),       # t (lanes)
                pl.BlockSpec((hid, dim), lambda i: (0, 0)),    # W1 (resident)
                pl.BlockSpec((hid, 1), lambda i: (0, 0)),      # b1
                pl.BlockSpec((dim, hid), lambda i: (0, 0)),    # W2 (resident)
                pl.BlockSpec((dim, 1), lambda i: (0, 0)),      # b2
            ],
            out_specs=pl.BlockSpec((dim, TB), lambda i: (0, i)),
        ),
        compiler_params=pltpu.CompilerParams(
            dimension_semantics=("parallel",),
        ),
        cost_estimate=cost,
    )(t_row, w1, b1_c, w2, b2_c)

    # Single cheap layout fix back to the module's (B, dim) convention.
    return out_t[:, :B].T


if __name__ == "__main__":
    key = jax.random.PRNGKey(0)
    kt, kw1, kb1, kw2, kb2 = jax.random.split(key, 5)

    B, dim = 8, 32
    hid = 4 * dim

    # Timesteps (floats, as after PyTorch's .float()).
    t = jax.random.uniform(kt, (B,), minval=0.0, maxval=1000.0,
                           dtype=jnp.float32)

    # Deterministic PyTorch-style nn.Linear init.
    bound1 = 1.0 / float(jnp.sqrt(dim))
    w1 = jax.random.uniform(kw1, (hid, dim), minval=-bound1, maxval=bound1,
                            dtype=jnp.float32)
    b1 = jax.random.uniform(kb1, (hid,), minval=-bound1, maxval=bound1,
                            dtype=jnp.float32)
    bound2 = 1.0 / float(jnp.sqrt(hid))
    w2 = jax.random.uniform(kw2, (dim, hid), minval=-bound2, maxval=bound2,
                            dtype=jnp.float32)
    b2 = jax.random.uniform(kb2, (dim,), minval=-bound2, maxval=bound2,
                            dtype=jnp.float32)

    out = jax.block_until_ready(
        time_embedding_forward(t, w1, b1, w2, b2, dim=dim))
    assert out.shape == (B, dim), out.shape

    # Pure-JAX reference matching the PyTorch module.
    half = dim // 2
    freqs = jnp.exp(jnp.arange(half, dtype=jnp.float32)
                    * (-jnp.log(10000.0) / half))
    e = t[:, None].astype(jnp.float32) * freqs[None, :]
    e = jnp.concatenate([jnp.sin(e), jnp.cos(e)], axis=1)
    h = jnp.maximum(e @ w1.T + b1, 0.0)
    ref = h @ w2.T + b2

    err = float(jnp.max(jnp.abs(out - ref)))
    assert jnp.allclose(out, ref, atol=1e-4, rtol=1e-4), err
    print("KERNEL_OK")
</pallas_src>

<mosaic_0001>
module attributes {stable_mosaic.version = 11 : i64} {
  func.func @_time_embedding_kernel(%arg0: i32, %arg1: memref<1x128xf32, #tpu.memory_space<vmem>>, %arg2: memref<128x32xf32, #tpu.memory_space<vmem>>, %arg3: memref<128x1xf32, #tpu.memory_space<vmem>>, %arg4: memref<32x128xf32, #tpu.memory_space<vmem>>, %arg5: memref<32x1xf32, #tpu.memory_space<vmem>>, %arg6: memref<32x128xf32, #tpu.memory_space<vmem>>) attributes {dimension_semantics = [#tpu.dimension_semantics<parallel>], iteration_bounds = array<i64: 1>, scalar_prefetch = 0 : i64, scratch_operands = 0 : i64, tpu.core_type = #tpu.core_type<tc>, window_params = [{transform_indices = @transform_0, window_bounds = array<i64: 1, 128>}, {pipeline_mode = #tpu.pipeline_mode<synchronous>, transform_indices = @transform_1, window_bounds = array<i64: 128, 32>}, {pipeline_mode = #tpu.pipeline_mode<synchronous>, transform_indices = @transform_2, window_bounds = array<i64: 128, 1>}, {pipeline_mode = #tpu.pipeline_mode<synchronous>, transform_indices = @transform_3, window_bounds = array<i64: 32, 128>}, {pipeline_mode = #tpu.pipeline_mode<synchronous>, transform_indices = @transform_4, window_bounds = array<i64: 32, 1>}, {transform_indices = @transform_5, window_bounds = array<i64: 32, 128>}]} {
    %0 = tpu.iota {dimensions = array<i32: 0>} : vector<16x1xi32>
    %1 = arith.sitofp %0 : vector<16x1xi32> to vector<16x1xf32>
    %cst = arith.constant -0.575646281 : f32
    %2 = vector.broadcast %cst : f32 to vector<16x1xf32>
    %3 = arith.mulf %1, %2 : vector<16x1xf32>
    %4 = math.exp %3 : vector<16x1xf32>
    %c0 = arith.constant 0 : index
    %c0_0 = arith.constant 0 : index
    %5 = vector.load %arg1[%c0, %c0_0] : memref<1x128xf32, #tpu.memory_space<vmem>>, vector<1x128xf32>
    %6 = vector.broadcast %4 : vector<16x1xf32> to vector<16x128xf32>
    %7 = vector.broadcast %5 : vector<1x128xf32> to vector<16x128xf32>
    %8 = arith.mulf %6, %7 : vector<16x128xf32>
    %9 = math.sin %8 : vector<16x128xf32>
    %10 = math.cos %8 : vector<16x128xf32>
    %11 = tpu.concatenate %9, %10 in 0 : vector<16x128xf32>, vector<16x128xf32> -> vector<32x128xf32>
    %c0_1 = arith.constant 0 : index
    %c0_2 = arith.constant 0 : index
    %12 = vector.load %arg2[%c0_1, %c0_2] : memref<128x32xf32, #tpu.memory_space<vmem>>, vector<128x32xf32>
    %cst_3 = arith.constant dense<0.000000e+00> : vector<128x128xf32>
    %13 = tpu.matmul %12, %11, %cst_3 {dimension_numbers = #tpu.dot_dimension_numbers<[1], [0], [0], [1], [0, 0, 1, 1], [], []>} : vector<128x32xf32>, vector<32x128xf32>, vector<128x128xf32> -> vector<128x128xf32>
    %c0_4 = arith.constant 0 : index
    %c0_5 = arith.constant 0 : index
    %14 = vector.load %arg3[%c0_4, %c0_5] : memref<128x1xf32, #tpu.memory_space<vmem>>, vector<128x1xf32>
    %15 = vector.broadcast %14 : vector<128x1xf32> to vector<128x128xf32>
    %16 = arith.addf %13, %15 : vector<128x128xf32>
    %cst_6 = arith.constant 0.000000e+00 : f32
    %17 = vector.broadcast %cst_6 : f32 to vector<128x128xf32>
    %18 = arith.maximumf %16, %17 : vector<128x128xf32>
    %c0_7 = arith.constant 0 : index
    %c0_8 = arith.constant 0 : index
    %19 = vector.load %arg4[%c0_7, %c0_8] : memref<32x128xf32, #tpu.memory_space<vmem>>, vector<32x128xf32>
    %cst_9 = arith.constant dense<0.000000e+00> : vector<32x128xf32>
    %20 = tpu.matmul %19, %18, %cst_9 {dimension_numbers = #tpu.dot_dimension_numbers<[1], [0], [0], [1], [0, 0, 1, 1], [], []>} : vector<32x128xf32>, vector<128x128xf32>, vector<32x128xf32> -> vector<32x128xf32>
    %c0_10 = arith.constant 0 : index
    %c0_11 = arith.constant 0 : index
    %21 = vector.load %arg5[%c0_10, %c0_11] : memref<32x1xf32, #tpu.memory_space<vmem>>, vector<32x1xf32>
    %22 = vector.broadcast %21 : vector<32x1xf32> to vector<32x128xf32>
    %23 = arith.addf %20, %22 : vector<32x128xf32>
    %c0_12 = arith.constant 0 : index
    %c0_13 = arith.constant 0 : index
    %24 = vector.load %arg6[%c0_12, %c0_13] : memref<32x128xf32, #tpu.memory_space<vmem>>, vector<32x128xf32>
    tpu.vector_store %arg6[%c0_12, %c0_13], %23 {strides = array<i32>} : memref<32x128xf32, #tpu.memory_space<vmem>>, vector<32x128xf32>,
    return
  }
  func.func @transform_0(%arg0: i32) -> (i32, i32) {
    %c0_i32 = arith.constant 0 : i32
    %c0_i32_0 = arith.constant 0 : i32
    return %c0_i32, %arg0 : i32, i32
  }
  func.func @transform_1(%arg0: i32) -> (i32, i32) {
    %c0_i32 = arith.constant 0 : i32
    %c0_i32_0 = arith.constant 0 : i32
    %c0_i32_1 = arith.constant 0 : i32
    return %c0_i32, %c0_i32_0 : i32, i32
  }
  func.func @transform_2(%arg0: i32) -> (i32, i32) {
    %c0_i32 = arith.constant 0 : i32
    %c0_i32_0 = arith.constant 0 : i32
    %c0_i32_1 = arith.constant 0 : i32
    return %c0_i32, %c0_i32_0 : i32, i32
  }
  func.func @transform_3(%arg0: i32) -> (i32, i32) {
    %c0_i32 = arith.constant 0 : i32
    %c0_i32_0 = arith.constant 0 : i32
    %c0_i32_1 = arith.constant 0 : i32
    return %c0_i32, %c0_i32_0 : i32, i32
  }
  func.func @transform_4(%arg0: i32) -> (i32, i32) {
    %c0_i32 = arith.constant 0 : i32
    %c0_i32_0 = arith.constant 0 : i32
    %c0_i32_1 = arith.constant 0 : i32
    return %c0_i32, %c0_i32_0 : i32, i32
  }
  func.func @transform_5(%arg0: i32) -> (i32, i32) {
    %c0_i32 = arith.constant 0 : i32
    %c0_i32_0 = arith.constant 0 : i32
    return %c0_i32, %arg0 : i32, i32
  }
}

</mosaic_0001>

<llo_original>
// kernel: time_embedding_forward.1
$region0: #{time_embedding_forward.1}
  #allocation0 [shape = 'u32[]', space=smem, size = 0x4, offset = 0x4, fixed_abs, tag = 'smem constant byte address 0x4 - core index']
  #allocation1 [shape = 'u32[144,128]{1,0:T(1,128)}', space=vmem, size = 0x12000, scoped, tag = 'internal scratch']
  %s0 = inlined_call_operand.vmem [shape: f32[1,128], index: 0, kind: input, shape index: {}]
  %s1 = inlined_call_operand.vmem [shape: f32[128,32], index: 1, kind: input, shape index: {}]
  %s2 = inlined_call_operand.vmem [shape: f32[128,1], index: 2, kind: input, shape index: {}]
  %s3 = inlined_call_operand.vmem [shape: f32[32,128], index: 3, kind: input, shape index: {}]
  %s4 = inlined_call_operand.vmem [shape: f32[32,1], index: 4, kind: input, shape index: {}]
  %s5 = inlined_call_operand.vmem [shape: f32[32,128], index: 5, kind: output, shape index: {}]
  %s6 = sld [smem:[#allocation0]]
  $region30: #{time_embedding_forward.1} parent=0
    _
  %s8 = ssub.s32 1, %s6
  %s9 = scalar_select 0, %s8, %s6
  // Predicated region
  $region2: #{time_embedding_forward.1} parent=0 // pred_check
    _
  $region3: #{time_embedding_forward.1} parent=0 // pred_check_branch
    %11 = sbr.rel (0) target = $region5
  $region4: #{time_embedding_forward.1} parent=0 // pred_region
    _
  $region5: #{time_embedding_forward.1} parent=0 // pred_fallthru
    _
  // Predicated region
  $region6: #{time_embedding_forward.1} parent=0 // pred_check
    _
  $region7: #{time_embedding_forward.1} parent=0 // pred_check_branch
    %13 = sbr.rel (0) target = $region9
  $region8: #{time_embedding_forward.1} parent=0 // pred_region
    _
  $region9: #{time_embedding_forward.1} parent=0 // pred_fallthru
    _
  // Predicated region
  $region10: #{time_embedding_forward.1} parent=0 // pred_check
    _
  $region11: #{time_embedding_forward.1} parent=0 // pred_check_branch
    %15 = sbr.rel (0) target = $region13
  $region12: #{time_embedding_forward.1} parent=0 // pred_region
    _
  $region13: #{time_embedding_forward.1} parent=0 // pred_fallthru
    _
  // Predicated region
  $region14: #{time_embedding_forward.1} parent=0 // pred_check
    _
  $region15: #{time_embedding_forward.1} parent=0 // pred_check_branch
    %17 = sbr.rel (0) target = $region17
  $region16: #{time_embedding_forward.1} parent=0 // pred_region
    _
  $region17: #{time_embedding_forward.1} parent=0 // pred_fallthru
    _
  // Predicated region
  $region18: #{time_embedding_forward.1} parent=0 // pred_check
    _
  $region19: #{time_embedding_forward.1} parent=0 // pred_check_branch
    %19 = sbr.rel (0) target = $region21
  $region20: #{time_embedding_forward.1} parent=0 // pred_region
    _
  $region21: #{time_embedding_forward.1} parent=0 // pred_fallthru
    _
  %v20 = vlaneseq
  %v21 = vshrl.u32 %v20, 7
  %v22 = vadd.s32 %v21, 8
  %v23 = vcvt.s32.f32 %v21
  %v24 = vcvt.s32.f32 %v22
  %v25 = vmul.f32 %v23, -0.5756463
  %v26 = vmul.f32 %v24, -0.5756463
  %v27 = vmul.f32 %v25, 1.442695
  %v28 = vpow.pop %v27
  %v29 = vmul.f32 %v26, 1.442695
  %v30 = vpow.pop %v29
  %v31 = vld [vmem:[%s0] sm:$0x1]
  %v33 = vlaneseq
  %v34 = vshrl.u32 %v33, 7
  %v35 = vsub.s32 0, %v34
  %v36 = vrot.slane %v31, %v35
  %v38 = vmul.f32 %v28, %v36
  %v39 = vmul.f32 %v30, %v36
  %v40 = vand.u32 2147483647, %v38
  %vm41 = vcmp.le.f32.partialorder %v40, 0.7853982
  %vm42 = vcmp.lt.s32.totalorder %v38, 0
  %v43 = vand.u32 %v38, 2139095040
  %v44 = vshrl.u32 %v43, 23
  %v45 = vsub.s32 %v44, 127
  %v46 = vand.u32 2147483647, %v38
  %v47 = vand.u32 %v46, 8388607
  %v48 = vor.u32 %v47, 8388608
  %v49 = vsub.s32 0, %v48
  %v50 = vadd.s32 %v45, 1
  %vm51 = vcmp.gt.s32.totalorder %v50, 0
  %v52 = vsel %vm51, %v50, 0
  %v53 = vshrl.u32 %v52, 5
  %v54 = vand.u32 %v52, 31
  %v55 = vsub.s32 32, %v54
  %v56 = vshrl.u32 683565275, %v55
  %v57 = vshll.u32 683565275, %v54
  %v58 = vshrl.u32 2475754826, %v55
  %v59 = vor.u32 %v57, %v58
  %v60 = vshll.u32 2475754826, %v54
  %v61 = vshrl.u32 2131351028, %v55
  %v62 = vor.u32 %v60, %v61
  %v63 = vshll.u32 2131351028, %v54
  %v64 = vshrl.u32 2102212464, %v55
  %v65 = vor.u32 %v63, %v64
  %v66 = vshll.u32 2102212464, %v54
  %v67 = vshrl.u32 920167782, %v55
  %v68 = vor.u32 %v66, %v67
  %v69 = vshll.u32 920167782, %v54
  %v70 = vshrl.u32 1326507024, %v55
  %v71 = vor.u32 %v69, %v70
  %vm72 = vcmp.lt.s32.totalorder %v53, 1
  %vm73 = vcmp.lt.s32.totalorder %v53, 2
  %vm74 = vcmp.lt.s32.totalorder %v53, 3
  %vm75 = vcmp.lt.s32.totalorder %v53, 4
  %v76 = vsel %vm72, %v56, %v59
  %v77 = vsel %vm75, %v65, 2102212464
  %v78 = vsel %vm74, %v62, %v77
  %v79 = vsel %vm73, %v76, %v78
  %v80 = vsel %vm72, %v59, %v62
  %v81 = vsel %vm75, %v68, 920167782
  %v82 = vsel %vm74, %v65, %v81
  %v83 = vsel %vm73, %v80, %v82
  %v84 = vsel %vm72, %v62, %v65
  %v85 = vsel %vm75, %v71, 1326507024
  %v86 = vsel %vm74, %v68, %v85
  %v87 = vsel %vm73, %v84, %v86
  %v88 = vshll.u32 %v48, 8
  %v89 = vmul.u32.u64.compose %v88, %v87
  %v90 = vextract.low.u32 %v89
  %v91 = vextract.high.u32 %v89
  %v92 = vmul.u32.u64.compose %v88, %v83
  %v93 = vextract.low.u32 %v92
  %v94 = vextract.high.u32 %v92
  %v95 = vmul.u32 %v88, %v79
  %v96 = vadd.s32 %v91, %v93
  %vm97 = vc.u32 %v91, %v93
  %v98 = vadd.s32 %v94, 1
  %v99 = vsel %vm97, %v98, %v94
  %v100 = vadd.s32 %v95, %v99
  %v101 = vadd.s32 %v100, 536870912
  %v102 = vshrl.u32 %v101, 30
  %v103 = vshll.u32 %v102, 30
  %v104 = vsub.s32 %v100, %v103
  %vm105 = vcmp.lt.s32.totalorder %v104, 0
  %v106 = vsub.s32 0, %v104
  %v107 = vsel %vm105, %v106, %v104
  %v108 = vclz %v107
  %v109 = vsub.s32 %v108, 2
  %vm110 = vcmp.gt.s32.totalorder 0, %v109
  %v111 = vsel %vm110, 0, %v109
  %v112 = vsub.s32 32, %v111
  %v113 = vshll.u32 %v104, %v111
  %v114 = vshrl.u32 %v96, %v112
  %v115 = vor.u32 %v113, %v114
  %v116 = vsub.s32 4294967266, %v111
  %v117 = vadd.s32 %v116, 127
  %v118 = vshll.u32 %v117, 23
  %v119 = vor.u32 4788187, %v118
  %v120 = vand.u32 2147483647, %v119
  %v122 = vcvt.s32.f32 %v115
  %v123 = vmul.f32 %v122, %v120
  %v124 = vxor.u32 %v123, 2147483648
  %v125 = vsel %vm42, %v124, %v123
  %v126 = vsub.s32 4, %v102
  %v127 = vsel %vm42, %v126, %v102
  %v128 = vsel %vm41, %v38, %v125
  %v129 = vsel %vm41, 0, %v127
  %v130 = vcosq.f32.pop %v128
  %v131 = vsinq.f32.pop %v128
  %vm132 = vweird.f32 %v38
  %v133 = vadd.s32 %v129, 3
  %v134 = vand.u32 %v133, 3
  %vm135 = vcmp.lt.s32.totalorder %v134, 2
  %vm136 = vcmp.eq.s32.totalorder %v134, 0
  %v137 = vxor.u32 %v131, 2147483648
  %v138 = vsel %vm136, %v130, %v137
  %vm139 = vcmp.eq.s32.totalorder %v134, 2
  %v140 = vxor.u32 %v130, 2147483648
  %v141 = vsel %vm139, %v140, %v131
  %v142 = vsel %vm135, %v138, %v141
  %v143 = vsel %vm132, nan, %v142
  %v144 = vand.u32 2147483647, %v39
  %vm145 = vcmp.le.f32.partialorder %v144, 0.7853982
  %vm146 = vcmp.lt.s32.totalorder %v39, 0
  %v147 = vand.u32 %v39, 2139095040
  %v148 = vshrl.u32 %v147, 23
  %v149 = vsub.s32 %v148, 127
  %v150 = vand.u32 2147483647, %v39
  %v151 = vand.u32 %v150, 8388607
  %v152 = vor.u32 %v151, 8388608
  %v153 = vsub.s32 0, %v152
  %v154 = vadd.s32 %v149, 1
  %vm155 = vcmp.gt.s32.totalorder %v154, 0
  %v156 = vsel %vm155, %v154, 0
  %v157 = vshrl.u32 %v156, 5
  %v158 = vand.u32 %v156, 31
  %v159 = vsub.s32 32, %v158
  %v160 = vshrl.u32 683565275, %v159
  %v161 = vshll.u32 683565275, %v158
  %v162 = vshrl.u32 2475754826, %v159
  %v163 = vor.u32 %v161, %v162
  %v164 = vshll.u32 2475754826, %v158
  %v165 = vshrl.u32 2131351028, %v159
  %v166 = vor.u32 %v164, %v165
  %v167 = vshll.u32 2131351028, %v158
  %v168 = vshrl.u32 2102212464, %v159
  %v169 = vor.u32 %v167, %v168
  %v170 = vshll.u32 2102212464, %v158
  %v171 = vshrl.u32 920167782, %v159
  %v172 = vor.u32 %v170, %v171
  %v173 = vshll.u32 920167782, %v158
  %v174 = vshrl.u32 1326507024, %v159
  %v175 = vor.u32 %v173, %v174
  %vm176 = vcmp.lt.s32.totalorder %v157, 1
  %vm177 = vcmp.lt.s32.totalorder %v157, 2
  %vm178 = vcmp.lt.s32.totalorder %v157, 3
  %vm179 = vcmp.lt.s32.totalorder %v157, 4
  %v180 = vsel %vm176, %v160, %v163
  %v181 = vsel %vm179, %v169, 2102212464
  %v182 = vsel %vm178, %v166, %v181
  %v183 = vsel %vm177, %v180, %v182
  %v184 = vsel %vm176, %v163, %v166
  %v185 = vsel %vm179, %v172, 920167782
  %v186 = vsel %vm178, %v169, %v185
  %v187 = vsel %vm177, %v184, %v186
  %v188 = vsel %vm176, %v166, %v169
  %v189 = vsel %vm179, %v175, 1326507024
  %v190 = vsel %vm178, %v172, %v189
  %v191 = vsel %vm177, %v188, %v190
  %v192 = vshll.u32 %v152, 8
  %v193 = vmul.u32.u64.compose %v192, %v191
  %v194 = vextract.low.u32 %v193
  %v195 = vextract.high.u32 %v193
  %v196 = vmul.u32.u64.compose %v192, %v187
  %v197 = vextract.low.u32 %v196
  %v198 = vextract.high.u32 %v196
  %v199 = vmul.u32 %v192, %v183
  %v200 = vadd.s32 %v195, %v197
  %vm201 = vc.u32 %v195, %v197
  %v202 = vadd.s32 %v198, 1
  %v203 = vsel %vm201, %v202, %v198
  %v204 = vadd.s32 %v199, %v203
  %v205 = vadd.s32 %v204, 536870912
  %v206 = vshrl.u32 %v205, 30
  %v207 = vshll.u32 %v206, 30
  %v208 = vsub.s32 %v204, %v207
  %vm209 = vcmp.lt.s32.totalorder %v208, 0
  %v210 = vsub.s32 0, %v208
  %v211 = vsel %vm209, %v210, %v208
  %v212 = vclz %v211
  %v213 = vsub.s32 %v212, 2
  %vm214 = vcmp.gt.s32.totalorder 0, %v213
  %v215 = vsel %vm214, 0, %v213
  %v216 = vsub.s32 32, %v215
  %v217 = vshll.u32 %v208, %v215
  %v218 = vshrl.u32 %v200, %v216
  %v219 = vor.u32 %v217, %v218
  %v220 = vsub.s32 4294967266, %v215
  %v221 = vadd.s32 %v220, 127
  %v222 = vshll.u32 %v221, 23
  %v223 = vor.u32 4788187, %v222
  %v224 = vand.u32 2147483647, %v223
  %v226 = vcvt.s32.f32 %v219
  %v227 = vmul.f32 %v226, %v224
  %v228 = vxor.u32 %v227, 2147483648
  %v229 = vsel %vm146, %v228, %v227
  %v230 = vsub.s32 4, %v206
  %v231 = vsel %vm146, %v230, %v206
  %v232 = vsel %vm145, %v39, %v229
  %v233 = vsel %vm145, 0, %v231
  %v234 = vcosq.f32.pop %v232
  %v235 = vsinq.f32.pop %v232
  %vm236 = vweird.f32 %v39
  %v237 = vadd.s32 %v233, 3
  %v238 = vand.u32 %v237, 3
  %vm239 = vcmp.lt.s32.totalorder %v238, 2
  %vm240 = vcmp.eq.s32.totalorder %v238, 0
  %v241 = vxor.u32 %v235, 2147483648
  %v242 = vsel %vm240, %v234, %v241
  %vm243 = vcmp.eq.s32.totalorder %v238, 2
  %v244 = vxor.u32 %v234, 2147483648
  %v245 = vsel %vm243, %v244, %v235
  %v246 = vsel %vm239, %v242, %v245
  %v247 = vsel %vm236, nan, %v246
  %v248 = vand.u32 2147483647, %v38
  %vm249 = vcmp.le.f32.partialorder %v248, 0.7853982
  %vm250 = vcmp.lt.s32.totalorder %v38, 0
  %v251 = vand.u32 %v38, 2139095040
  %v252 = vshrl.u32 %v251, 23
  %v253 = vsub.s32 %v252, 127
  %v254 = vand.u32 2147483647, %v38
  %v255 = vand.u32 %v254, 8388607
  %v256 = vor.u32 %v255, 8388608
  %v257 = vsub.s32 0, %v256
  %v258 = vadd.s32 %v253, 1
  %vm259 = vcmp.gt.s32.totalorder %v258, 0
  %v260 = vsel %vm259, %v258, 0
  %v261 = vshrl.u32 %v260, 5
  %v262 = vand.u32 %v260, 31
  %v263 = vsub.s32 32, %v262
  %v264 = vshrl.u32 683565275, %v263
  %v265 = vshll.u32 683565275, %v262
  %v266 = vshrl.u32 2475754826, %v263
  %v267 = vor.u32 %v265, %v266
  %v268 = vshll.u32 2475754826, %v262
  %v269 = vshrl.u32 2131351028, %v263
  %v270 = vor.u32 %v268, %v269
  %v271 = vshll.u32 2131351028, %v262
  %v272 = vshrl.u32 2102212464, %v263
  %v273 = vor.u32 %v271, %v272
  %v274 = vshll.u32 2102212464, %v262
  %v275 = vshrl.u32 920167782, %v263
  %v276 = vor.u32 %v274, %v275
  %v277 = vshll.u32 920167782, %v262
  %v278 = vshrl.u32 1326507024, %v263
  %v279 = vor.u32 %v277, %v278
  %vm280 = vcmp.lt.s32.totalorder %v261, 1
  %vm281 = vcmp.lt.s32.totalorder %v261, 2
  %vm282 = vcmp.lt.s32.totalorder %v261, 3
  %vm283 = vcmp.lt.s32.totalorder %v261, 4
  %v284 = vsel %vm280, %v264, %v267
  %v285 = vsel %vm283, %v273, 2102212464
  %v286 = vsel %vm282, %v270, %v285
  %v287 = vsel %vm281, %v284, %v286
  %v288 = vsel %vm280, %v267, %v270
  %v289 = vsel %vm283, %v276, 920167782
  %v290 = vsel %vm282, %v273, %v289
  %v291 = vsel %vm281, %v288, %v290
  %v292 = vsel %vm280, %v270, %v273
  %v293 = vsel %vm283, %v279, 1326507024
  %v294 = vsel %vm282, %v276, %v293
  %v295 = vsel %vm281, %v292, %v294
  %v296 = vshll.u32 %v256, 8
  %v297 = vmul.u32.u64.compose %v296, %v295
  %v298 = vextract.low.u32 %v297
  %v299 = vextract.high.u32 %v297
  %v300 = vmul.u32.u64.compose %v296, %v291
  %v301 = vextract.low.u32 %v300
  %v302 = vextract.high.u32 %v300
  %v303 = vmul.u32 %v296, %v287
  %v304 = vadd.s32 %v299, %v301
  %vm305 = vc.u32 %v299, %v301
  %v306 = vadd.s32 %v302, 1
  %v307 = vsel %vm305, %v306, %v302
  %v308 = vadd.s32 %v303, %v307
  %v309 = vadd.s32 %v308, 536870912
  %v310 = vshrl.u32 %v309, 30
  %v311 = vshll.u32 %v310, 30
  %v312 = vsub.s32 %v308, %v311
  %vm313 = vcmp.lt.s32.totalorder %v312, 0
  %v314 = vsub.s32 0, %v312
  %v315 = vsel %vm313, %v314, %v312
  %v316 = vclz %v315
  %v317 = vsub.s32 %v316, 2
  %vm318 = vcmp.gt.s32.totalorder 0, %v317
  %v319 = vsel %vm318, 0, %v317
  %v320 = vsub.s32 32, %v319
  %v321 = vshll.u32 %v312, %v319
  %v322 = vshrl.u32 %v304, %v320
  %v323 = vor.u32 %v321, %v322
  %v324 = vsub.s32 4294967266, %v319
  %v325 = vadd.s32 %v324, 127
  %v326 = vshll.u32 %v325, 23
  %v327 = vor.u32 4788187, %v326
  %v328 = vand.u32 2147483647, %v327
  %v330 = vcvt.s32.f32 %v323
  %v331 = vmul.f32 %v330, %v328
  %v332 = vxor.u32 %v331, 2147483648
  %v333 = vsel %vm250, %v332, %v331
  %v334 = vsub.s32 4, %v310
  %v335 = vsel %vm250, %v334, %v310
  %v336 = vsel %vm249, %v38, %v333
  %v337 = vsel %vm249, 0, %v335
  %v338 = vcosq.f32.pop %v336
  %v339 = vsinq.f32.pop %v336
  %vm340 = vweird.f32 %v38
  %v341 = vand.u32 %v337, 3
  %vm342 = vcmp.lt.s32.totalorder %v341, 2
  %vm343 = vcmp.eq.s32.totalorder %v341, 0
  %v344 = vxor.u32 %v339, 2147483648
  %v345 = vsel %vm343, %v338, %v344
  %vm346 = vcmp.eq.s32.totalorder %v341, 2
  %v347 = vxor.u32 %v338, 2147483648
  %v348 = vsel %vm346, %v347, %v339
  %v349 = vsel %vm342, %v345, %v348
  %v350 = vsel %vm340, nan, %v349
  %v351 = vand.u32 2147483647, %v39
  %vm352 = vcmp.le.f32.partialorder %v351, 0.7853982
  %vm353 = vcmp.lt.s32.totalorder %v39, 0
  %v354 = vand.u32 %v39, 2139095040
  %v355 = vshrl.u32 %v354, 23
  %v356 = vsub.s32 %v355, 127
  %v357 = vand.u32 2147483647, %v39
  %v358 = vand.u32 %v357, 8388607
  %v359 = vor.u32 %v358, 8388608
  %v360 = vsub.s32 0, %v359
  %v361 = vadd.s32 %v356, 1
  %vm362 = vcmp.gt.s32.totalorder %v361, 0
  %v363 = vsel %vm362, %v361, 0
  %v364 = vshrl.u32 %v363, 5
  %v365 = vand.u32 %v363, 31
  %v366 = vsub.s32 32, %v365
  %v367 = vshrl.u32 683565275, %v366
  %v368 = vshll.u32 683565275, %v365
  %v369 = vshrl.u32 2475754826, %v366
  %v370 = vor.u32 %v368, %v369
  %v371 = vshll.u32 2475754826, %v365
  %v372 = vshrl.u32 2131351028, %v366
  %v373 = vor.u32 %v371, %v372
  %v374 = vshll.u32 2131351028, %v365
  %v375 = vshrl.u32 2102212464, %v366
  %v376 = vor.u32 %v374, %v375
  %v377 = vshll.u32 2102212464, %v365
  %v378 = vshrl.u32 920167782, %v366
  %v379 = vor.u32 %v377, %v378
  %v380 = vshll.u32 920167782, %v365
  %v381 = vshrl.u32 1326507024, %v366
  %v382 = vor.u32 %v380, %v381
  %vm383 = vcmp.lt.s32.totalorder %v364, 1
  %vm384 = vcmp.lt.s32.totalorder %v364, 2
  %vm385 = vcmp.lt.s32.totalorder %v364, 3
  %vm386 = vcmp.lt.s32.totalorder %v364, 4
  %v387 = vsel %vm383, %v367, %v370
  %v388 = vsel %vm386, %v376, 2102212464
  %v389 = vsel %vm385, %v373, %v388
  %v390 = vsel %vm384, %v387, %v389
  %v391 = vsel %vm383, %v370, %v373
  %v392 = vsel %vm386, %v379, 920167782
  %v393 = vsel %vm385, %v376, %v392
  %v394 = vsel %vm384, %v391, %v393
  %v395 = vsel %vm383, %v373, %v376
  %v396 = vsel %vm386, %v382, 1326507024
  %v397 = vsel %vm385, %v379, %v396
  %v398 = vsel %vm384, %v395, %v397
  %v399 = vshll.u32 %v359, 8
  %v400 = vmul.u32.u64.compose %v399, %v398
  %v401 = vextract.low.u32 %v400
  %v402 = vextract.high.u32 %v400
  %v403 = vmul.u32.u64.compose %v399, %v394
  %v404 = vextract.low.u32 %v403
  %v405 = vextract.high.u32 %v403
  %v406 = vmul.u32 %v399, %v390
  %v407 = vadd.s32 %v402, %v404
  %vm408 = vc.u32 %v402, %v404
  %v409 = vadd.s32 %v405, 1
  %v410 = vsel %vm408, %v409, %v405
  %v411 = vadd.s32 %v406, %v410
  %v412 = vadd.s32 %v411, 536870912
  %v413 = vshrl.u32 %v412, 30
  %v414 = vshll.u32 %v413, 30
  %v415 = vsub.s32 %v411, %v414
  %vm416 = vcmp.lt.s32.totalorder %v415, 0
  %v417 = vsub.s32 0, %v415
  %v418 = vsel %vm416, %v417, %v415
  %v419 = vclz %v418
  %v420 = vsub.s32 %v419, 2
  %vm421 = vcmp.gt.s32.totalorder 0, %v420
  %v422 = vsel %vm421, 0, %v420
  %v423 = vsub.s32 32, %v422
  %v424 = vshll.u32 %v415, %v422
  %v425 = vshrl.u32 %v407, %v423
  %v426 = vor.u32 %v424, %v425
  %v427 = vsub.s32 4294967266, %v422
  %v428 = vadd.s32 %v427, 127
  %v429 = vshll.u32 %v428, 23
  %v430 = vor.u32 4788187, %v429
  %v431 = vand.u32 2147483647, %v430
  %v433 = vcvt.s32.f32 %v426
  %v434 = vmul.f32 %v433, %v431
  %v435 = vxor.u32 %v434, 2147483648
  %v436 = vsel %vm353, %v435, %v434
  %v437 = vsub.s32 4, %v413
  %v438 = vsel %vm353, %v437, %v413
  %v439 = vsel %vm352, %v39, %v436
  %v440 = vsel %vm352, 0, %v438
  %v441 = vcosq.f32.pop %v439
  %v442 = vsinq.f32.pop %v439
  %vm443 = vweird.f32 %v39
  %v444 = vand.u32 %v440, 3
  %vm445 = vcmp.lt.s32.totalorder %v444, 2
  %vm446 = vcmp.eq.s32.totalorder %v444, 0
  %v447 = vxor.u32 %v442, 2147483648
  %v448 = vsel %vm446, %v441, %v447
  %vm449 = vcmp.eq.s32.totalorder %v444, 2
  %v450 = vxor.u32 %v441, 2147483648
  %v451 = vsel %vm449, %v450, %v442
  %v452 = vsel %vm445, %v448, %v451
  %v453 = vsel %vm443, nan, %v452
  %v454 = vld [vmem:[%s1] sm:$0xff]
  %v455 = vld [vmem:[%s1 + $0x8] sm:$0xff]
  %v456 = vld [vmem:[%s1 + $0x10] sm:$0xff]
  %v457 = vld [vmem:[%s1 + $0x18] sm:$0xff]
  %v458 = vld [vmem:[%s1 + $0x20] sm:$0xff]
  %v459 = vld [vmem:[%s1 + $0x28] sm:$0xff]
  %v460 = vld [vmem:[%s1 + $0x30] sm:$0xff]
  %v461 = vld [vmem:[%s1 + $0x38] sm:$0xff]
  %v462 = vld [vmem:[%s1 + $0x40] sm:$0xff]
  %v463 = vld [vmem:[%s1 + $0x48] sm:$0xff]
  %v464 = vld [vmem:[%s1 + $0x50] sm:$0xff]
  %v465 = vld [vmem:[%s1 + $0x58] sm:$0xff]
  %v466 = vld [vmem:[%s1 + $0x60] sm:$0xff]
  %v467 = vld [vmem:[%s1 + $0x68] sm:$0xff]
  %v468 = vld [vmem:[%s1 + $0x70] sm:$0xff]
  %v469 = vld [vmem:[%s1 + $0x78] sm:$0xff]
  %v470 = vld [vmem:[%s2] sm:$0xff]
  %v471 = vld [vmem:[%s2 + $0x8] sm:$0xff]
  %v472 = vld [vmem:[%s2 + $0x10] sm:$0xff]
  %v473 = vld [vmem:[%s2 + $0x18] sm:$0xff]
  %v474 = vld [vmem:[%s2 + $0x20] sm:$0xff]
  %v475 = vld [vmem:[%s2 + $0x28] sm:$0xff]
  %v476 = vld [vmem:[%s2 + $0x30] sm:$0xff]
  %v477 = vld [vmem:[%s2 + $0x38] sm:$0xff]
  %v478 = vld [vmem:[%s2 + $0x40] sm:$0xff]
  %v479 = vld [vmem:[%s2 + $0x48] sm:$0xff]
  %v480 = vld [vmem:[%s2 + $0x50] sm:$0xff]
  %v481 = vld [vmem:[%s2 + $0x58] sm:$0xff]
  %v482 = vld [vmem:[%s2 + $0x60] sm:$0xff]
  %v483 = vld [vmem:[%s2 + $0x68] sm:$0xff]
  %v484 = vld [vmem:[%s2 + $0x70] sm:$0xff]
  %v485 = vld [vmem:[%s2 + $0x78] sm:$0xff]
  %487 = vset.pattern.permute.xlu0 0
  %488 = vperm.xlu0 %487, %v470
  %v489 = vpop.permute.xlu0 %488
  %492 = vset.pattern.permute.xlu0 0
  %493 = vperm.xlu0 %492, %v471
  %v494 = vpop.permute.xlu0 %493
  %497 = vset.pattern.permute.xlu0 0
  %498 = vperm.xlu0 %497, %v472
  %v499 = vpop.permute.xlu0 %498
  %502 = vset.pattern.permute.xlu0 0
  %503 = vperm.xlu0 %502, %v473
  %v504 = vpop.permute.xlu0 %503
  %507 = vset.pattern.permute.xlu0 0
  %508 = vperm.xlu0 %507, %v474
  %v509 = vpop.permute.xlu0 %508
  %512 = vset.pattern.permute.xlu0 0
  %513 = vperm.xlu0 %512, %v475
  %v514 = vpop.permute.xlu0 %513
  %517 = vset.pattern.permute.xlu0 0
  %518 = vperm.xlu0 %517, %v476
  %v519 = vpop.permute.xlu0 %518
  %522 = vset.pattern.permute.xlu0 0
  %523 = vperm.xlu0 %522, %v477
  %v524 = vpop.permute.xlu0 %523
  %527 = vset.pattern.permute.xlu0 0
  %528 = vperm.xlu0 %527, %v478
  %v529 = vpop.permute.xlu0 %528
  %532 = vset.pattern.permute.xlu0 0
  %533 = vperm.xlu0 %532, %v479
  %v534 = vpop.permute.xlu0 %533
  %537 = vset.pattern.permute.xlu0 0
  %538 = vperm.xlu0 %537, %v480
  %v539 = vpop.permute.xlu0 %538
  %542 = vset.pattern.permute.xlu0 0
  %543 = vperm.xlu0 %542, %v481
  %v544 = vpop.permute.xlu0 %543
  %547 = vset.pattern.permute.xlu0 0
  %548 = vperm.xlu0 %547, %v482
  %v549 = vpop.permute.xlu0 %548
  %552 = vset.pattern.permute.xlu0 0
  %553 = vperm.xlu0 %552, %v483
  %v554 = vpop.permute.xlu0 %553
  %557 = vset.pattern.permute.xlu0 0
  %558 = vperm.xlu0 %557, %v484
  %v559 = vpop.permute.xlu0 %558
  %562 = vset.pattern.permute.xlu0 0
  %563 = vperm.xlu0 %562, %v485
  %v564 = vpop.permute.xlu0 %563
  %vm566 = vcmask 261120
  %v568 = vsel %vm566, %v454, 0
  %v571 = vsel %vm566, %v455, 0
  %v574 = vsel %vm566, %v456, 0
  %v577 = vsel %vm566, %v457, 0
  %v580 = vsel %vm566, %v458, 0
  %v583 = vsel %vm566, %v459, 0
  %v586 = vsel %vm566, %v460, 0
  %v589 = vsel %vm566, %v461, 0
  %v592 = vsel %vm566, %v462, 0
  %v595 = vsel %vm566, %v463, 0
  %v598 = vsel %vm566, %v464, 0
  %v601 = vsel %vm566, %v465, 0
  %v604 = vsel %vm566, %v466, 0
  %v607 = vsel %vm566, %v467, 0
  %v610 = vsel %vm566, %v468, 0
  %v613 = vsel %vm566, %v469, 0
  %615 = vmatprep.subr.mxu0 0.0
  %616 = vmatpush1.msra.mxu0 %v143
  %617 = vmatprep.subr.mxu0 0.0
  %618 = vmatpush1.msra.mxu0 %v247
  %619 = vmatprep.subr.mxu0 0.0
  %620 = vmatpush1.msra.mxu0 %v350
  %621 = vmatprep.subr.mxu0 0.0
  %622 = vmatpush1.msra.mxu0 %v453
  %623 = vmatprep.subr.mxu0 0.0
  %624 = vmatpush1.msra.mxu0 0.0
  %625 = vmatprep.subr.mxu0 0.0
  %626 = vmatpush1.msra.mxu0 0.0
  %627 = vmatprep.subr.mxu0 0.0
  %628 = vmatpush1.msra.mxu0 0.0
  %629 = vmatprep.subr.mxu0 0.0
  %630 = vmatpush1.msra.mxu0 0.0
  %631 = vmatprep.subr.mxu0 0.0
  %632 = vmatpush1.msra.mxu0 0.0
  %633 = vmatprep.subr.mxu0 0.0
  %634 = vmatpush1.msra.mxu0 0.0
  %635 = vmatprep.subr.mxu0 0.0
  %636 = vmatpush1.msra.mxu0 0.0
  %637 = vmatprep.subr.mxu0 0.0
  %638 = vmatpush1.msra.mxu0 0.0
  %639 = vmatprep.subr.mxu0 0.0
  %640 = vmatpush1.msra.mxu0 0.0
  %641 = vmatprep.subr.mxu0 0.0
  %642 = vmatpush1.msra.mxu0 0.0
  %643 = vmatprep.subr.mxu0 0.0
  %644 = vmatpush1.msra.mxu0 0.0
  %645 = vmatprep.subr.mxu0 0.0
  %646 = vmatpush1.msra.mxu0 0.0
  %647 = vmatprep.subr.mxu0 0.0
  %648 = vmatpush1.msra.mxu0 0.0
  %649 = vmatprep.subr.mxu0 0.0
  %650 = vmatpush1.msra.mxu0 0.0
  %651 = vmatprep.subr.mxu0 0.0
  %652 = vmatpush1.msra.mxu0 0.0
  %653 = vmatprep.subr.mxu0 0.0
  %654 = vmatpush1.msra.mxu0 0.0
  %655 = vmatprep.subr.mxu0 0.0
  %656 = vmatpush1.msra.mxu0 0.0
  %657 = vmatprep.subr.mxu0 0.0
  %658 = vmatpush1.msra.mxu0 0.0
  %659 = vmatprep.subr.mxu0 0.0
  %660 = vmatpush1.msra.mxu0 0.0
  %661 = vmatprep.subr.mxu0 0.0
  %662 = vmatpush1.msra.mxu0 0.0
  %663 = vmatprep.subr.mxu0 0.0
  %664 = vmatpush1.msra.mxu0 0.0
  %665 = vmatprep.subr.mxu0 0.0
  %666 = vmatpush1.msra.mxu0 0.0
  %667 = vmatprep.subr.mxu0 0.0
  %668 = vmatpush1.msra.mxu0 0.0
  %669 = vmatprep.subr.mxu0 0.0
  %670 = vmatpush1.msra.mxu0 0.0
  %671 = vmatprep.subr.mxu0 0.0
  %672 = vmatpush1.msra.mxu0 0.0
  %673 = vmatprep.subr.mxu0 0.0
  %674 = vmatpush1.msra.mxu0 0.0
  %675 = vmatprep.subr.mxu0 0.0
  %676 = vmatpush1.msra.mxu0 0.0
  %677 = vmatprep.subr.mxu0 0.0
  %678 = vmatpush1.msra.mxu0 0.0
  %679 = vmatprep.mubr.f32.mxu0 0.0
  %680 = vmatmul.mubr.f32.gmra.mrb[0].mxu0 %v568
  %v681 = vpop.f32.mrb[0].mxu0
  %v682 = vadd.f32 %v489, %v681
  %v683 = vpop.f32.mrb[0].mxu0
  %684 = vmatprep.mubr.f32.mxu0 0.0
  %685 = vmatmul.mubr.f32.gmra.mrb[0].mxu0 %v571
  %v686 = vpop.f32.mrb[0].mxu0
  %v687 = vadd.f32 %v494, %v686
  %v688 = vpop.f32.mrb[0].mxu0
  %689 = vmatprep.mubr.f32.mxu0 0.0
  %690 = vmatmul.mubr.f32.gmra.mrb[0].mxu0 %v574
  %v691 = vpop.f32.mrb[0].mxu0
  %v692 = vadd.f32 %v499, %v691
  %v693 = vpop.f32.mrb[0].mxu0
  %694 = vmatprep.mubr.f32.mxu0 0.0
  %695 = vmatmul.mubr.f32.gmra.mrb[0].mxu0 %v577
  %v696 = vpop.f32.mrb[0].mxu0
  %v697 = vadd.f32 %v504, %v696
  %v698 = vpop.f32.mrb[0].mxu0
  %699 = vmatprep.mubr.f32.mxu0 0.0
  %700 = vmatmul.mubr.f32.gmra.mrb[0].mxu0 %v580
  %v701 = vpop.f32.mrb[0].mxu0
  %v702 = vadd.f32 %v509, %v701
  %v703 = vpop.f32.mrb[0].mxu0
  %704 = vmatprep.mubr.f32.mxu0 0.0
  %705 = vmatmul.mubr.f32.gmra.mrb[0].mxu0 %v583
  %v706 = vpop.f32.mrb[0].mxu0
  %v707 = vadd.f32 %v514, %v706
  %v708 = vpop.f32.mrb[0].mxu0
  %709 = vmatprep.mubr.f32.mxu0 0.0
  %710 = vmatmul.mubr.f32.gmra.mrb[0].mxu0 %v586
  %v711 = vpop.f32.mrb[0].mxu0
  %v712 = vadd.f32 %v519, %v711
  %v713 = vpop.f32.mrb[0].mxu0
  %714 = vmatprep.mubr.f32.mxu0 0.0
  %715 = vmatmul.mubr.f32.gmra.mrb[0].mxu0 %v589
  %v716 = vpop.f32.mrb[0].mxu0
  %v717 = vadd.f32 %v524, %v716
  %v718 = vpop.f32.mrb[0].mxu0
  %719 = vmatprep.mubr.f32.mxu0 0.0
  %720 = vmatmul.mubr.f32.gmra.mrb[0].mxu0 %v592
  %v721 = vpop.f32.mrb[0].mxu0
  %v722 = vadd.f32 %v529, %v721
  %v723 = vpop.f32.mrb[0].mxu0
  %724 = vmatprep.mubr.f32.mxu0 0.0
  %725 = vmatmul.mubr.f32.gmra.mrb[0].mxu0 %v595
  %v726 = vpop.f32.mrb[0].mxu0
  %v727 = vadd.f32 %v534, %v726
  %v728 = vpop.f32.mrb[0].mxu0
  %729 = vmatprep.mubr.f32.mxu0 0.0
  %730 = vmatmul.mubr.f32.gmra.mrb[0].mxu0 %v598
  %v731 = vpop.f32.mrb[0].mxu0
  %v732 = vadd.f32 %v539, %v731
  %v733 = vpop.f32.mrb[0].mxu0
  %734 = vmatprep.mubr.f32.mxu0 0.0
  %735 = vmatmul.mubr.f32.gmra.mrb[0].mxu0 %v601
  %v736 = vpop.f32.mrb[0].mxu0
  %v737 = vadd.f32 %v544, %v736
  %v738 = vpop.f32.mrb[0].mxu0
  %739 = vmatprep.mubr.f32.mxu0 0.0
  %740 = vmatmul.mubr.f32.gmra.mrb[0].mxu0 %v604
  %v741 = vpop.f32.mrb[0].mxu0
  %v742 = vadd.f32 %v549, %v741
  %v743 = vpop.f32.mrb[0].mxu0
  %744 = vmatprep.mubr.f32.mxu0 0.0
  %745 = vmatmul.mubr.f32.gmra.mrb[0].mxu0 %v607
  %v746 = vpop.f32.mrb[0].mxu0
  %v747 = vadd.f32 %v554, %v746
  %v748 = vpop.f32.mrb[0].mxu0
  %749 = vmatprep.mubr.f32.mxu0 0.0
  %750 = vmatmul.mubr.f32.gmra.mrb[0].mxu0 %v610
  %v751 = vpop.f32.mrb[0].mxu0
  %v752 = vadd.f32 %v559, %v751
  %v753 = vpop.f32.mrb[0].mxu0
  %754 = vmatprep.mubr.f32.mxu0 0.0
  %755 = vmatmul.mubr.f32.gmra.mrb[0].mxu0 %v613
  %v756 = vpop.f32.mrb[0].mxu0
  %v757 = vadd.f32 %v564, %v756
  %v758 = vpop.f32.mrb[0].mxu0
  %759 = vdwg.mxu0
  %v760 = vmax.f32 %v682, 0.0
  %v761 = vmax.f32 %v687, 0.0
  %v762 = vmax.f32 %v692, 0.0
  %v763 = vmax.f32 %v697, 0.0
  %v764 = vmax.f32 %v702, 0.0
  %v765 = vmax.f32 %v707, 0.0
  %v766 = vmax.f32 %v712, 0.0
  %v767 = vmax.f32 %v717, 0.0
  %v768 = vmax.f32 %v722, 0.0
  %v769 = vmax.f32 %v727, 0.0
  %v770 = vmax.f32 %v732, 0.0
  %v771 = vmax.f32 %v737, 0.0
  %v772 = vmax.f32 %v742, 0.0
  %v773 = vmax.f32 %v747, 0.0
  %v774 = vmax.f32 %v752, 0.0
  %v775 = vmax.f32 %v757, 0.0
  %v776 = vld [vmem:[%s3] sm:$0xff]
  %v777 = vld [vmem:[%s3 + $0x8] sm:$0xff]
  %v778 = vld [vmem:[%s3 + $0x10] sm:$0xff]
  %v779 = vld [vmem:[%s3 + $0x18] sm:$0xff]
  %v780 = vld [vmem:[%s4] sm:$0xff]
  %v781 = vld [vmem:[%s4 + $0x8] sm:$0xff]
  %v782 = vld [vmem:[%s4 + $0x10] sm:$0xff]
  %v783 = vld [vmem:[%s4 + $0x18] sm:$0xff]
  %785 = vset.pattern.permute.xlu0 0
  %786 = vperm.xlu0 %785, %v780
  %v787 = vpop.permute.xlu0 %786
  %790 = vset.pattern.permute.xlu0 0
  %791 = vperm.xlu0 %790, %v781
  %v792 = vpop.permute.xlu0 %791
  %795 = vset.pattern.permute.xlu0 0
  %796 = vperm.xlu0 %795, %v782
  %v797 = vpop.permute.xlu0 %796
  %800 = vset.pattern.permute.xlu0 0
  %801 = vperm.xlu0 %800, %v783
  %v802 = vpop.permute.xlu0 %801
  %804 = vmatprep.subr.mxu0 0.0
  %805 = vmatpush1.msra.mxu0 %v760
  %806 = vmatprep.subr.mxu0 0.0
  %807 = vmatpush1.msra.mxu0 %v761
  %808 = vmatprep.subr.mxu0 0.0
  %809 = vmatpush1.msra.mxu0 %v762
  %810 = vmatprep.subr.mxu0 0.0
  %811 = vmatpush1.msra.mxu0 %v763
  %812 = vmatprep.subr.mxu0 0.0
  %813 = vmatpush1.msra.mxu0 %v764
  %814 = vmatprep.subr.mxu0 0.0
  %815 = vmatpush1.msra.mxu0 %v765
  %816 = vmatprep.subr.mxu0 0.0
  %817 = vmatpush1.msra.mxu0 %v766
  %818 = vmatprep.subr.mxu0 0.0
  %819 = vmatpush1.msra.mxu0 %v767
  %820 = vmatprep.subr.mxu0 0.0
  %821 = vmatpush1.msra.mxu0 %v768
  %822 = vmatprep.subr.mxu0 0.0
  %823 = vmatpush1.msra.mxu0 %v769
  %824 = vmatprep.subr.mxu0 0.0
  %825 = vmatpush1.msra.mxu0 %v770
  %826 = vmatprep.subr.mxu0 0.0
  %827 = vmatpush1.msra.mxu0 %v771
  %828 = vmatprep.subr.mxu0 0.0
  %829 = vmatpush1.msra.mxu0 %v772
  %830 = vmatprep.subr.mxu0 0.0
  %831 = vmatpush1.msra.mxu0 %v773
  %832 = vmatprep.subr.mxu0 0.0
  %833 = vmatpush1.msra.mxu0 %v774
  %834 = vmatprep.subr.mxu0 0.0
  %835 = vmatpush1.msra.mxu0 %v775
  %836 = vmatprep.subr.mxu0 0.0
  %837 = vmatpush1.msra.mxu0 0.0
  %838 = vmatprep.subr.mxu0 0.0
  %839 = vmatpush1.msra.mxu0 0.0
  %840 = vmatprep.subr.mxu0 0.0
  %841 = vmatpush1.msra.mxu0 0.0
  %842 = vmatprep.subr.mxu0 0.0
  %843 = vmatpush1.msra.mxu0 0.0
  %844 = vmatprep.subr.mxu0 0.0
  %845 = vmatpush1.msra.mxu0 0.0
  %846 = vmatprep.subr.mxu0 0.0
  %847 = vmatpush1.msra.mxu0 0.0
  %848 = vmatprep.subr.mxu0 0.0
  %849 = vmatpush1.msra.mxu0 0.0
  %850 = vmatprep.subr.mxu0 0.0
  %851 = vmatpush1.msra.mxu0 0.0
  %852 = vmatprep.subr.mxu0 0.0
  %853 = vmatpush1.msra.mxu0 0.0
  %854 = vmatprep.subr.mxu0 0.0
  %855 = vmatpush1.msra.mxu0 0.0
  %856 = vmatprep.subr.mxu0 0.0
  %857 = vmatpush1.msra.mxu0 0.0
  %858 = vmatprep.subr.mxu0 0.0
  %859 = vmatpush1.msra.mxu0 0.0
  %860 = vmatprep.subr.mxu0 0.0
  %861 = vmatpush1.msra.mxu0 0.0
  %862 = vmatprep.subr.mxu0 0.0
  %863 = vmatpush1.msra.mxu0 0.0
  %864 = vmatprep.subr.mxu0 0.0
  %865 = vmatpush1.msra.mxu0 0.0
  %866 = vmatprep.subr.mxu0 0.0
  %867 = vmatpush1.msra.mxu0 0.0
  %868 = vmatprep.mubr.f32.mxu0 0.0
  %869 = vmatmul.mubr.f32.gmra.mrb[0].mxu0 %v776
  %v870 = vpop.f32.mrb[0].mxu0
  %v871 = vadd.f32 %v787, %v870
  %v872 = vpop.f32.mrb[0].mxu0
  %873 = vmatprep.mubr.f32.mxu0 0.0
  %874 = vmatmul.mubr.f32.gmra.mrb[0].mxu0 %v777
  %v875 = vpop.f32.mrb[0].mxu0
  %v876 = vadd.f32 %v792, %v875
  %v877 = vpop.f32.mrb[0].mxu0
  %878 = vmatprep.mubr.f32.mxu0 0.0
  %879 = vmatmul.mubr.f32.gmra.mrb[0].mxu0 %v778
  %v880 = vpop.f32.mrb[0].mxu0
  %v881 = vadd.f32 %v797, %v880
  %v882 = vpop.f32.mrb[0].mxu0
  %883 = vmatprep.mubr.f32.mxu0 0.0
  %884 = vmatmul.mubr.f32.gmra.mrb[0].mxu0 %v779
  %v885 = vpop.f32.mrb[0].mxu0
  %v886 = vadd.f32 %v802, %v885
  %v887 = vpop.f32.mrb[0].mxu0
  %888 = vdwg.mxu0
  %889 = vst [vmem:[%s5] sm:$0xff] %v871
  %890 = vst [vmem:[%s5 + $0x8] sm:$0xff] %v876
  %891 = vst [vmem:[%s5 + $0x10] sm:$0xff] %v881
  %892 = vst [vmem:[%s5 + $0x18] sm:$0xff] %v886
  // Predicated region
  $region22: #{time_embedding_forward.1} parent=0 // pred_check
    _
  $region23: #{time_embedding_forward.1} parent=0 // pred_check_branch
    %894 = sbr.rel (0) target = $region25
  $region24: #{time_embedding_forward.1} parent=0 // pred_region
    _
  $region25: #{time_embedding_forward.1} parent=0 // pred_fallthru
    _
  // Predicated region
  $region26: #{time_embedding_forward.1} parent=0 // pred_check
    _
  $region27: #{time_embedding_forward.1} parent=0 // pred_check_branch
    %896 = sbr.rel (0) target = $region29
  $region28: #{time_embedding_forward.1} parent=0 // pred_region
    _
  $region29: #{time_embedding_forward.1} parent=0 // pred_fallthru
    _

</llo_original>
